<compile_context>
chip_gen: v6e
topology: v6e:2x2x1
jax: 0.10.0
libtpu: 0.0.40
codegen_flags: <defaults>
</compile_context>

<pallas_src>
import functools

import jax
import jax.numpy as jnp
from jax import lax
from jax.experimental import pallas as pl
from jax.experimental.pallas import tpu as pltpu


LANE = 128
SUBLANE = 8


def _round_up(x, m):
    return ((x + m - 1) // m) * m


def _use_bf16_tanh():
    """bf16 EUP fast path exists on v6e/v7x; keep f32 tanh elsewhere (e.g. v5e)."""
    try:
        kind = jax.devices()[0].device_kind.lower()
    except Exception:
        return False
    return ("v6" in kind) or ("v7" in kind)


# ---- one-time probe: does this jax build accept pipeline_mode=pl.Buffered(1)? ----
_BUFFERED_SUPPORTED = None


def _copy_kernel(x_ref, o_ref):
    o_ref[...] = x_ref[...]


def _buffered_blockspec_supported():
    global _BUFFERED_SUPPORTED
    if _BUFFERED_SUPPORTED is None:
        try:
            x = jnp.zeros((SUBLANE, LANE), jnp.float32)
            y = pl.pallas_call(
                _copy_kernel,
                out_shape=jax.ShapeDtypeStruct((SUBLANE, LANE), jnp.float32),
                grid=(1,),
                in_specs=[pl.BlockSpec((SUBLANE, LANE), lambda i: (0, 0),
                                       pipeline_mode=pl.Buffered(1))],
                out_specs=pl.BlockSpec((SUBLANE, LANE), lambda i: (0, 0)),
            )(x)
            jax.block_until_ready(y)
            _BUFFERED_SUPPORTED = True
        except Exception:
            _BUFFERED_SUPPORTED = False
    return _BUFFERED_SUPPORTED


# ----------------------------- Pallas kernel ------------------------------

def _tag_kernel(emb_ref, wenc_ref, wtag_ref, btag_ref, tgt_ref,
                logits_ref, lsum_ref, *, tanh_bf16):
    """Fused: h = tanh(emb @ w_enc); logits = h @ w_tag + b_tag; masked per-tile CE sum.

    emb_ref    : (TR, H)  bf16  row tile of embeddings
    wenc_ref   : (H, H)   bf16  resident encoder weight (single-buffered when supported)
    wtag_ref   : (H, Cp)  bf16  resident head weight, class dim padded to 128 lanes (zeros)
    btag_ref   : (1, Cp)  f32   head bias, padded entries = -1e30
    tgt_ref    : (TR, 1)  i32   target class per token; -1 == ignored (mask folded in)
    logits_ref : (TR, Cp) bf16  lane-dense logits tile (padded classes included)
    lsum_ref   : (8, 128) f32   per-tile masked-CE partial sum, broadcast over one vreg
    """
    # fused synthetic encoder dense + tanh (bf16 MXU, f32 accumulate)
    acc = jnp.dot(emb_ref[...], wenc_ref[...],
                  preferred_element_type=jnp.float32)                      # (TR, H) f32
    if tanh_bf16:
        hb = jnp.tanh(acc.astype(jnp.bfloat16))                            # v6e/v7x bf16 EUP
    else:
        hb = jnp.tanh(acc).astype(jnp.bfloat16)                            # f32 EUP path

    # head matmul (bf16 MXU) + bias; padded classes get -1e30 -> vanish in softmax
    logits = jnp.dot(hb, wtag_ref[...],
                     preferred_element_type=jnp.float32) + btag_ref[...]   # (TR, Cp) f32
    logits_ref[...] = logits.astype(logits_ref.dtype)                      # bf16 writeback

    r, c = logits.shape
    m = jnp.max(logits, axis=-1, keepdims=True)                            # (TR, 1)
    lse = m + jnp.log(jnp.sum(jnp.exp(logits - m), axis=-1, keepdims=True))

    tgt = tgt_ref[...]                                                     # (TR, 1) i32
    cls_iota = lax.broadcasted_iota(jnp.int32, (r, c), 1)                  # (TR, Cp)
    picked = jnp.sum(jnp.where(cls_iota == tgt, logits, 0.0),
                     axis=-1, keepdims=True)                               # (TR, 1)
    valid = (tgt >= 0).astype(jnp.float32)                                 # (TR, 1)

    # in-kernel reduction: one lane-dense vreg per tile instead of a (TR,1) masked store
    tile_sum = jnp.sum((lse - picked) * valid)
    lsum_ref[...] = jnp.broadcast_to(tile_sum, lsum_ref.shape)


# ----------------------------- pallas_call wrapper -------------------------

def tag_head_fused(emb_rows, w_enc, w_tag_pad, b_tag_pad, tgt_rows,
                   *, tile_rows=1024, tanh_bf16=False):
    """emb_rows:(R,H) bf16, w_enc:(H,H) bf16, w_tag_pad:(H,Cp) bf16, b_tag_pad:(1,Cp) f32,
       tgt_rows:(R,1) i32 (-1 == ignored token)
       -> logits (R,Cp) bf16, masked-CE sum over valid tokens (f32 scalar)."""
    R, H = emb_rows.shape
    Cp = w_tag_pad.shape[1]

    # Row tile: multiple of 8 sublanes.  Prefer >= 2 grid tiles (v7x has 2 TensorCores on
    # the "parallel" axis); cap at tile_rows to amortize ~0.35 us per-grid-step overhead.
    if R >= 2 * tile_rows:
        TR = tile_rows
    else:
        TR = min(_round_up(max(pl.cdiv(R, 2), 1), SUBLANE), _round_up(R, SUBLANE))

    Rp = _round_up(R, TR)
    if Rp != R:
        pad = Rp - R
        emb_rows = jnp.pad(emb_rows, ((0, pad), (0, 0)))
        tgt_rows = jnp.pad(tgt_rows, ((0, pad), (0, 0)), constant_values=-1)  # ignored rows
    n_tiles = Rp // TR

    # single-buffer resident operands (constant index_map -> double buffering is pure waste)
    w_kwargs = ({"pipeline_mode": pl.Buffered(1)}
                if _buffered_blockspec_supported() else {})

    logits, lsum = pl.pallas_call(
        functools.partial(_tag_kernel, tanh_bf16=tanh_bf16),
        out_shape=(jax.ShapeDtypeStruct((Rp, Cp), jnp.bfloat16),
                   jax.ShapeDtypeStruct((n_tiles * SUBLANE, LANE), jnp.float32)),
        grid=(n_tiles,),
        in_specs=[
            pl.BlockSpec((TR, H), lambda i: (i, 0)),                # emb rows (pipelined)
            pl.BlockSpec((H, H), lambda i: (0, 0), **w_kwargs),     # w_enc (resident)
            pl.BlockSpec((H, Cp), lambda i: (0, 0), **w_kwargs),    # w_tag (resident)
            pl.BlockSpec((1, Cp), lambda i: (0, 0), **w_kwargs),    # b_tag (resident)
            pl.BlockSpec((TR, 1), lambda i: (i, 0)),                # targets (+folded mask)
        ],
        out_specs=(pl.BlockSpec((TR, Cp), lambda i: (i, 0)),
                   pl.BlockSpec((SUBLANE, LANE), lambda i: (i, 0))),
        compiler_params=pltpu.CompilerParams(
            dimension_semantics=("parallel",),        # row tiles are independent
            vmem_limit_bytes=48 * 1024 * 1024,        # TR=1024 working set; v5e default
        ),                                            # scoped limit is only 16 MiB
    )(emb_rows, w_enc, w_tag_pad, b_tag_pad, tgt_rows)

    loss_sum = jnp.sum(lsum[::SUBLANE, 0])            # one partial per tile
    return logits[:R], loss_sum


# ----------------------------- EntityModel forward --------------------------

class EntityModelPallas:
    def __init__(self, key, vocab_size, hidden, max_seq, num_tag, num_classify_tag):
        self.num_tag = num_tag
        self.num_classify_tag = num_classify_tag
        self.tanh_bf16 = _use_bf16_tanh()

        ks = jax.random.split(key, 8)
        s = 0.02
        # synthetic "BERT" parameters (f32 masters for the tiny classify head)
        word_emb = s * jax.random.normal(ks[0], (vocab_size, hidden), jnp.float32)
        type_emb = s * jax.random.normal(ks[1], (2, hidden), jnp.float32)
        pos_emb = s * jax.random.normal(ks[2], (max_seq, hidden), jnp.float32)
        self.w_enc = s * jax.random.normal(ks[3], (hidden, hidden), jnp.float32)
        self.w_pool = s * jax.random.normal(ks[4], (hidden, hidden), jnp.float32)
        self.b_pool = jnp.zeros((hidden,), jnp.float32)
        # output heads (nn.Linear(BASE_MODEL_DIM, num_tag / num_classify_tag))
        w_tag = s * jax.random.normal(ks[5], (hidden, num_tag), jnp.float32)
        b_tag = 0.01 * jnp.arange(num_tag, dtype=jnp.float32)
        self.w_cls = s * jax.random.normal(ks[6], (hidden, num_classify_tag), jnp.float32)
        self.b_cls = 0.01 * jnp.arange(num_classify_tag, dtype=jnp.float32)

        # kernel-side parameter forms: bf16 MXU operands, class dim padded to 128 lanes.
        # Embedding tables live in bf16 so the gather+add writes bf16 rows directly
        # (no f32 staging array between the lookup and the kernel).
        cp = _round_up(max(num_tag, 1), LANE)
        self.cp = cp
        self.word_emb_bf16 = word_emb.astype(jnp.bfloat16)
        self.type_emb_bf16 = type_emb.astype(jnp.bfloat16)
        self.pos_emb_bf16 = pos_emb.astype(jnp.bfloat16)
        self.w_enc_bf16 = self.w_enc.astype(jnp.bfloat16)
        self.w_tag_pad = (jnp.zeros((hidden, cp), jnp.float32)
                          .at[:, :num_tag].set(w_tag).astype(jnp.bfloat16))
        self.b_tag_pad = jnp.full((1, cp), -1e30, jnp.float32).at[0, :num_tag].set(b_tag)

    def forward(self, ids, mask, token_type_ids, target_tag, target_classification_tag):
        B, T = ids.shape
        H = self.word_emb_bf16.shape[1]

        # --- synthetic BERT embeddings, gathered & summed directly in bf16 ---
        emb = (self.word_emb_bf16[ids] + self.type_emb_bf16[token_type_ids]
               + self.pos_emb_bf16[None, :T, :])                            # (B, T, H) bf16

        # --- Pallas hot path: fused encoder dense+tanh + tag head + masked CE ---
        emb_rows = emb.reshape(B * T, H)
        # fold attention mask into the target: -1 marks ignored tokens (CE ignore_index)
        tgt_rows = jnp.where(mask == 1, target_tag, -1).reshape(B * T, 1).astype(jnp.int32)

        logits_pad, loss_sum = tag_head_fused(
            emb_rows, self.w_enc_bf16, self.w_tag_pad, self.b_tag_pad, tgt_rows,
            tanh_bf16=self.tanh_bf16)
        tag = logits_pad[:, :self.num_tag].astype(jnp.float32).reshape(B, T, self.num_tag)

        # exact mean over valid tokens; guard all-masked batches against 0/0
        denom = jnp.maximum(jnp.sum(mask.astype(jnp.float32)), 1.0)
        loss_tag = loss_sum / denom

        # --- classify head: (B,H)@(H,C), microscopic -> plain JAX (per perf review) ---
        cls_emb = emb[:, 0, :].astype(jnp.float32)                 # CLS token embedding
        o1_cls = jnp.tanh(cls_emb @ self.w_enc)                    # CLS through encoder
        o2 = jnp.tanh(o1_cls @ self.w_pool + self.b_pool)          # BERT-style tanh pooler
        classify_tag = o2 @ self.w_cls + self.b_cls                # (B, num_classify_tag)

        cls_tgt = target_classification_tag.astype(jnp.int32)
        lse = jax.nn.logsumexp(classify_tag, axis=-1)
        picked = jnp.take_along_axis(classify_tag, cls_tgt[:, None], axis=-1)[:, 0]
        loss_cls = jnp.mean(lse - picked)

        loss = (loss_tag + loss_cls) / 2.0
        return tag, classify_tag, loss


# ----------------------------------- main -----------------------------------

if __name__ == "__main__":
    B, T, H = 2, 8, 32
    VOCAB = 50
    NUM_TAG, NUM_CLS = 5, 3

    key = jax.random.PRNGKey(0)
    k_model, k_ids, k_ttag, k_ctag, k_mask = jax.random.split(key, 5)

    model = EntityModelPallas(k_model, VOCAB, H, T, NUM_TAG, NUM_CLS)

    ids = jax.random.randint(k_ids, (B, T), 0, VOCAB, dtype=jnp.int32)
    token_type_ids = jnp.zeros((B, T), jnp.int32)
    # attention mask: first rows active, pad tail with zeros
    mask = (jnp.arange(T)[None, :] < jnp.array([T, T - 3])[:, None]).astype(jnp.int32)
    target_tag = jax.random.randint(k_ttag, (B, T), 0, NUM_TAG, dtype=jnp.int32)
    target_classification_tag = jax.random.randint(k_ctag, (B,), 0, NUM_CLS, dtype=jnp.int32)

    tag, classify_tag, loss = model.forward(
        ids, mask, token_type_ids, target_tag, target_classification_tag)

    jax.block_until_ready((tag, classify_tag, loss))
    assert tag.shape == (B, T, NUM_TAG)
    assert classify_tag.shape == (B, NUM_CLS)
    assert bool(jnp.isfinite(loss))
    print("KERNEL_OK")
</pallas_src>

<mosaic_0001>
module attributes {stable_mosaic.version = 11 : i64} {
  func.func @_copy_kernel(%arg0: i32, %arg1: memref<8x128xf32, #tpu.memory_space<vmem>>, %arg2: memref<8x128xf32, #tpu.memory_space<vmem>>) attributes {dimension_semantics = [#tpu.dimension_semantics<arbitrary>], iteration_bounds = array<i64: 1>, scalar_prefetch = 0 : i64, scratch_operands = 0 : i64, tpu.core_type = #tpu.core_type<tc>, window_params = [{pipeline_mode = #tpu.pipeline_mode<synchronous>, transform_indices = @transform_0, window_bounds = array<i64: 8, 128>}, {pipeline_mode = #tpu.pipeline_mode<synchronous>, transform_indices = @transform_1, window_bounds = array<i64: 8, 128>}]} {
    %c0 = arith.constant 0 : index
    %c0_0 = arith.constant 0 : index
    %0 = vector.load %arg1[%c0, %c0_0] : memref<8x128xf32, #tpu.memory_space<vmem>>, vector<8x128xf32>
    %c0_1 = arith.constant 0 : index
    %c0_2 = arith.constant 0 : index
    %1 = vector.load %arg2[%c0_1, %c0_2] : memref<8x128xf32, #tpu.memory_space<vmem>>, vector<8x128xf32>
    tpu.vector_store %arg2[%c0_1, %c0_2], %0 {strides = array<i32>} : memref<8x128xf32, #tpu.memory_space<vmem>>, vector<8x128xf32>,
    return
  }
  func.func @transform_0(%arg0: i32) -> (i32, i32) {
    %c0_i32 = arith.constant 0 : i32
    %c0_i32_0 = arith.constant 0 : i32
    %c0_i32_1 = arith.constant 0 : i32
    return %c0_i32, %c0_i32_0 : i32, i32
  }
  func.func @transform_1(%arg0: i32) -> (i32, i32) {
    %c0_i32 = arith.constant 0 : i32
    %c0_i32_0 = arith.constant 0 : i32
    %c0_i32_1 = arith.constant 0 : i32
    return %c0_i32, %c0_i32_0 : i32, i32
  }
}

module attributes {stable_mosaic.version = 11 : i64} {
  func.func @_tag_kernel(%arg0: i32, %arg1: memref<8x32xbf16, #tpu.memory_space<vmem>>, %arg2: memref<32x32xbf16, #tpu.memory_space<vmem>>, %arg3: memref<32x128xbf16, #tpu.memory_space<vmem>>, %arg4: memref<1x128xf32, #tpu.memory_space<vmem>>, %arg5: memref<8x1xi32, #tpu.memory_space<vmem>>, %arg6: memref<8x128xbf16, #tpu.memory_space<vmem>>, %arg7: memref<8x128xf32, #tpu.memory_space<vmem>>) attributes {dimension_semantics = [#tpu.dimension_semantics<parallel>], iteration_bounds = array<i64: 2>, scalar_prefetch = 0 : i64, scratch_operands = 0 : i64, tpu.core_type = #tpu.core_type<tc>, window_params = [{transform_indices = @transform_0, window_bounds = array<i64: 8, 32>}, {pipeline_mode = #tpu.pipeline_mode<synchronous>, transform_indices = @transform_1, window_bounds = array<i64: 32, 32>}, {pipeline_mode = #tpu.pipeline_mode<synchronous>, transform_indices = @transform_2, window_bounds = array<i64: 32, 128>}, {pipeline_mode = #tpu.pipeline_mode<synchronous>, transform_indices = @transform_3, window_bounds = array<i64: 1, 128>}, {transform_indices = @transform_4, window_bounds = array<i64: 8, 1>}, {transform_indices = @transform_5, window_bounds = array<i64: 8, 128>}, {transform_indices = @transform_6, window_bounds = array<i64: 8, 128>}]} {
    %c0 = arith.constant 0 : index
    %c0_0 = arith.constant 0 : index
    %0 = vector.load %arg1[%c0, %c0_0] : memref<8x32xbf16, #tpu.memory_space<vmem>>, vector<8x32xbf16>
    %c0_1 = arith.constant 0 : index
    %c0_2 = arith.constant 0 : index
    %1 = vector.load %arg2[%c0_1, %c0_2] : memref<32x32xbf16, #tpu.memory_space<vmem>>, vector<32x32xbf16>
    %cst = arith.constant dense<0.000000e+00> : vector<8x32xf32>
    %2 = tpu.matmul %0, %1, %cst {dimension_numbers = #tpu.dot_dimension_numbers<[1], [0], [0], [1], [0, 0, 1, 1], [], []>} : vector<8x32xbf16>, vector<32x32xbf16>, vector<8x32xf32> -> vector<8x32xf32>
    %3 = math.tanh %2 : vector<8x32xf32>
    %4 = arith.truncf %3 : vector<8x32xf32> to vector<8x32xbf16>
    %c0_3 = arith.constant 0 : index
    %c0_4 = arith.constant 0 : index
    %5 = vector.load %arg3[%c0_3, %c0_4] : memref<32x128xbf16, #tpu.memory_space<vmem>>, vector<32x128xbf16>
    %cst_5 = arith.constant dense<0.000000e+00> : vector<8x128xf32>
    %6 = tpu.matmul %4, %5, %cst_5 {dimension_numbers = #tpu.dot_dimension_numbers<[1], [0], [0], [1], [0, 0, 1, 1], [], []>} : vector<8x32xbf16>, vector<32x128xbf16>, vector<8x128xf32> -> vector<8x128xf32>
    %c0_6 = arith.constant 0 : index
    %c0_7 = arith.constant 0 : index
    %7 = vector.load %arg4[%c0_6, %c0_7] : memref<1x128xf32, #tpu.memory_space<vmem>>, vector<1x128xf32>
    %8 = vector.broadcast %7 : vector<1x128xf32> to vector<8x128xf32>
    %9 = arith.addf %6, %8 : vector<8x128xf32>
    %10 = arith.truncf %9 : vector<8x128xf32> to vector<8x128xbf16>
    %c0_8 = arith.constant 0 : index
    %c0_9 = arith.constant 0 : index
    %11 = vector.load %arg6[%c0_8, %c0_9] : memref<8x128xbf16, #tpu.memory_space<vmem>>, vector<8x128xbf16>
    tpu.vector_store %arg6[%c0_8, %c0_9], %10 {strides = array<i32>} : memref<8x128xbf16, #tpu.memory_space<vmem>>, vector<8x128xbf16>,
    %cst_10 = arith.constant dense<0xFF800000> : vector<8xf32>
    %12 = vector.multi_reduction <maximumf>, %9, %cst_10 [1] : vector<8x128xf32> to vector<8xf32>
    %13 = vector.shape_cast %12 : vector<8xf32> to vector<8x1xf32>
    %14 = vector.broadcast %13 : vector<8x1xf32> to vector<8x128xf32>
    %15 = arith.subf %9, %14 : vector<8x128xf32>
    %16 = math.exp %15 : vector<8x128xf32>
    %cst_11 = arith.constant dense<0.000000e+00> : vector<8xf32>
    %17 = vector.multi_reduction <add>, %16, %cst_11 [1] : vector<8x128xf32> to vector<8xf32>
    %18 = vector.shape_cast %17 : vector<8xf32> to vector<8x1xf32>
    %19 = math.log %18 : vector<8x1xf32>
    %20 = arith.addf %13, %19 : vector<8x1xf32>
    %c0_12 = arith.constant 0 : index
    %c0_13 = arith.constant 0 : index
    %21 = vector.load %arg5[%c0_12, %c0_13] : memref<8x1xi32, #tpu.memory_space<vmem>>, vector<8x1xi32>
    %22 = tpu.iota {dimensions = array<i32: 1>} : vector<8x128xi32>
    %23 = vector.broadcast %21 : vector<8x1xi32> to vector<8x128xi32>
    %24 = arith.cmpi eq, %22, %23 : vector<8x128xi32>
    %cst_14 = arith.constant 0.000000e+00 : f32
    %25 = vector.broadcast %cst_14 : f32 to vector<8x128xf32>
    %26 = arith.select %24, %9, %25 : vector<8x128xi1>, vector<8x128xf32>
    %cst_15 = arith.constant dense<0.000000e+00> : vector<8xf32>
    %27 = vector.multi_reduction <add>, %26, %cst_15 [1] : vector<8x128xf32> to vector<8xf32>
    %28 = vector.shape_cast %27 : vector<8xf32> to vector<8x1xf32>
    %c0_i32 = arith.constant 0 : i32
    %29 = vector.broadcast %c0_i32 : i32 to vector<8x1xi32>
    %30 = arith.cmpi sge, %21, %29 : vector<8x1xi32>
    %31 = arith.extui %30 : vector<8x1xi1> to vector<8x1xi32>
    %32 = arith.sitofp %31 : vector<8x1xi32> to vector<8x1xf32>
    %33 = arith.subf %20, %28 : vector<8x1xf32>
    %34 = arith.mulf %33, %32 : vector<8x1xf32>
    %35 = vector.shape_cast %34 : vector<8x1xf32> to vector<1x8x1xf32>
    %cst_16 = arith.constant dense<0.000000e+00> : vector<1xf32>
    %36 = vector.multi_reduction <add>, %35, %cst_16 [1, 2] : vector<1x8x1xf32> to vector<1xf32>
    %37 = vector.shape_cast %36 : vector<1xf32> to vector<1x1x1xf32>
    %38 = vector.extract %37[0, 0, 0] : f32 from vector<1x1x1xf32>
    %39 = vector.broadcast %38 : f32 to vector<8x128xf32>
    %c0_17 = arith.constant 0 : index
    %c0_18 = arith.constant 0 : index
    %40 = vector.load %arg7[%c0_17, %c0_18] : memref<8x128xf32, #tpu.memory_space<vmem>>, vector<8x128xf32>
    tpu.vector_store %arg7[%c0_17, %c0_18], %39 {strides = array<i32>} : memref<8x128xf32, #tpu.memory_space<vmem>>, vector<8x128xf32>,
    return
  }
  func.func @transform_0(%arg0: i32) -> (i32, i32) {
    %c0_i32 = arith.constant 0 : i32
    %c0_i32_0 = arith.constant 0 : i32
    return %arg0, %c0_i32 : i32, i32
  }
  func.func @transform_1(%arg0: i32) -> (i32, i32) {
    %c0_i32 = arith.constant 0 : i32
    %c0_i32_0 = arith.constant 0 : i32
    %c0_i32_1 = arith.constant 0 : i32
    return %c0_i32, %c0_i32_0 : i32, i32
  }
  func.func @transform_2(%arg0: i32) -> (i32, i32) {
    %c0_i32 = arith.constant 0 : i32
    %c0_i32_0 = arith.constant 0 : i32
    %c0_i32_1 = arith.constant 0 : i32
    return %c0_i32, %c0_i32_0 : i32, i32
  }
  func.func @transform_3(%arg0: i32) -> (i32, i32) {
    %c0_i32 = arith.constant 0 : i32
    %c0_i32_0 = arith.constant 0 : i32
    %c0_i32_1 = arith.constant 0 : i32
    return %c0_i32, %c0_i32_0 : i32, i32
  }
  func.func @transform_4(%arg0: i32) -> (i32, i32) {
    %c0_i32 = arith.constant 0 : i32
    %c0_i32_0 = arith.constant 0 : i32
    return %arg0, %c0_i32 : i32, i32
  }
  func.func @transform_5(%arg0: i32) -> (i32, i32) {
    %c0_i32 = arith.constant 0 : i32
    %c0_i32_0 = arith.constant 0 : i32
    return %arg0, %c0_i32 : i32, i32
  }
  func.func @transform_6(%arg0: i32) -> (i32, i32) {
    %c0_i32 = arith.constant 0 : i32
    %c0_i32_0 = arith.constant 0 : i32
    return %arg0, %c0_i32 : i32, i32
  }
}

</mosaic_0001>

<llo_original>
// kernel: tpu_custom_call.1
$region0: #{tpu_custom_call.1}
  #allocation0 [shape = 'u32[]', space=smem, size = 0x4, offset = 0x4, fixed_abs, tag = 'smem constant byte address 0x4 - core index']
  #allocation1 [shape = 'u32[144,128]{1,0:T(1,128)}', space=vmem, size = 0x12000, scoped, tag = 'internal scratch']
  %s0 = inlined_call_operand.hbm [shape: f32[8,128], index: 0, kind: input, shape index: {}]
  %s1 = inlined_call_operand.hbm [shape: f32[8,128], index: 1, kind: output, shape index: {}]
  %s2 = sld [smem:[#allocation0]]
  $region18: #{tpu_custom_call.1} parent=0
    _
  %s4 = ssub.s32 1, %s2
  %s5 = scalar_select 0, %s4, %s2
  $region1: #{tpu_custom_call.1} parent=0
    #allocation2 [shape = 'u8[4096]{0}', space=vmem, size = 0x1000, scoped, tag = 'input window, operand 0, single buffered']
    #allocation3 [shape = 's32[1]{0}', space=sflag, size = 0x4, scoped, tag = 'scoped memory for tpu_custom_call.1']
    #allocation4 [shape = 's32[1]{0}', space=sflag, size = 0x4, scoped, tag = 'scoped memory for tpu_custom_call.1']
    #allocation5 [shape = 'u8[4096]{0}', space=vmem, size = 0x1000, scoped, tag = 'output window, operand 0, single buffered']
    %6 = vsyncpa [#allocation3], 0
    %7 = vsyncpa [#allocation4], 0
    // Predicated region
    $region2: #{tpu_custom_call.1} parent=1 // pred_check
      _
    $region3: #{tpu_custom_call.1} parent=1 // pred_check_branch
      %9 = sbr.rel (0) target = $region5
    $region4: #{tpu_custom_call.1} parent=1 // pred_region
      %s11 = ssub.s32 128, 128
      %12 = vsyncadd [#allocation3], %s11
      %s14 = sshll.u32 [#allocation2], 4
      %s15 = int_to_ptr.vmem [resolvable:$true] %s14
      %17 = dma.hbm_to_vmem [thread:$0]  %s0, 128, %s15, [#allocation3]
    $region5: #{tpu_custom_call.1} parent=1 // pred_fallthru
      _
    // Predicated region
    $region6: #{tpu_custom_call.1} parent=1 // pred_check
      _
    $region7: #{tpu_custom_call.1} parent=1 // pred_check_branch
      %19 = sbr.rel (0) target = $region9
    $region8: #{tpu_custom_call.1} parent=1 // pred_region
      %20 = dma.done [#allocation3], 128
    $region9: #{tpu_custom_call.1} parent=1 // pred_fallthru
      _
    %v21 = vld [vmem:[#allocation2] sm:$0xff]
    %22 = vst [vmem:[#allocation5] sm:$0xff] %v21
    // Predicated region
    $region10: #{tpu_custom_call.1} parent=1 // pred_check
      _
    $region11: #{tpu_custom_call.1} parent=1 // pred_check_branch
      %24 = sbr.rel (0) target = $region13
    $region12: #{tpu_custom_call.1} parent=1 // pred_region
      %s26 = ssub.s32 128, 128
      %27 = vsyncadd [#allocation4], %s26
      %s29 = sshll.u32 [#allocation5], 4
      %s30 = int_to_ptr.vmem [resolvable:$true] %s29
      %32 = dma.vmem_to_hbm [thread:$0]  %s30, 128, %s1, [#allocation4]
    $region13: #{tpu_custom_call.1} parent=1 // pred_fallthru
      _
    // Predicated region
    $region14: #{tpu_custom_call.1} parent=1 // pred_check
      _
    $region15: #{tpu_custom_call.1} parent=1 // pred_check_branch
      %34 = sbr.rel (0) target = $region17
    $region16: #{tpu_custom_call.1} parent=1 // pred_region
      %35 = dma.done [#allocation4], 128
    $region17: #{tpu_custom_call.1} parent=1 // pred_fallthru
      _
    %36 = vsyncpa [#allocation3], 1
    %37 = vsyncpa [#allocation4], 1

// kernel: tpu_custom_call.1
$region0: #{tpu_custom_call.1}
  #allocation0 [shape = 'u32[]', space=smem, size = 0x4, offset = 0x4, fixed_abs, tag = 'smem constant byte address 0x4 - core index']
  #allocation1 [shape = 'u32[144,128]{1,0:T(1,128)}', space=vmem, size = 0x12000, scoped, tag = 'internal scratch']
  %s0 = inlined_call_operand.hbm [shape: bf16[16,32], index: 0, kind: input, shape index: {}]
  %s1 = inlined_call_operand.vmem [shape: bf16[32,32], index: 1, kind: input, shape index: {}]
  %s2 = inlined_call_operand.hbm [shape: bf16[32,128], index: 2, kind: input, shape index: {}]
  %s3 = inlined_call_operand.vmem [shape: f32[1,128], index: 3, kind: input, shape index: {}]
  %s4 = inlined_call_operand.vmem [shape: s32[16,1], index: 4, kind: input, shape index: {}]
  %s5 = inlined_call_operand.hbm [shape: bf16[16,128], index: 5, kind: output, shape index: {0}]
  %s6 = inlined_call_operand.hbm [shape: f32[16,128], index: 6, kind: output, shape index: {1}]
  %7 = xla_tuple %s5, %s6
  %s8 = sld [smem:[#allocation0]]
  $region69: #{tpu_custom_call.1} parent=0
    _
  %s10 = ssub.s32 1, %s8
  %s11 = scalar_select 0, %s10, %s8
  $region1: #{tpu_custom_call.1} parent=0
    #allocation2 [shape = 'u8[4096]{0}', space=vmem, size = 0x1000, scoped, tag = 'input window, operand 0']
    #allocation3 [shape = 's32[2]{0}', space=sflag, size = 0x8, scoped, tag = 'scoped memory for tpu_custom_call.1']
    #allocation4 [shape = 's32[2]{0}', space=sflag, size = 0x8, scoped, tag = 'scoped memory for tpu_custom_call.1']
    #allocation5 [shape = 'u8[8192]{0}', space=vmem, size = 0x2000, scoped, tag = 'input window, operand 2, single buffered']
    #allocation6 [shape = 's32[1]{0}', space=sflag, size = 0x4, scoped, tag = 'scoped memory for tpu_custom_call.1']
    #allocation7 [shape = 'u8[4096]{0}', space=vmem, size = 0x1000, scoped, tag = 'output window, operand 0']
    #allocation8 [shape = 'u8[8192]{0}', space=vmem, size = 0x2000, scoped, tag = 'output window, operand 1']
    #allocation9 [shape = 's32[2]{0}', space=sflag, size = 0x8, scoped, tag = 'scoped memory for tpu_custom_call.1']
    %12 = vsyncpa [#allocation3], 0
    %s13 = scalar_lea.sflag [#allocation3], 1
    %14 = vsyncpa %s13, 0
    %15 = vsyncpa [#allocation6], 0
    %16 = vsyncpa [#allocation4], 0
    %s17 = scalar_lea.sflag [#allocation4], 1
    %18 = vsyncpa %s17, 0
    %19 = vsyncpa [#allocation9], 0
    %s20 = scalar_lea.sflag [#allocation9], 1
    %21 = vsyncpa %s20, 0
    loop: start=0, step=1, limit=4
    $region2: #{tpu_custom_call.1} parent=1 // loop_pre_header
      _
    $region3: #{tpu_custom_call.1} parent=1 // loop_header
      %s23 = sphi 0, %s27
      %p24 = scmp.ge.s32.totalorder %s23, 4
      %s33 = sphi 0, %s35
      %s36 = sphi 0, %s33
      %s37 = sphi 0, %s36
      %s53 = sphi 0, %s37
      %s57 = sphi 0, %s57
      %s59 = sphi 0, %s57
      %s60 = sphi 0, %s59
      %s74 = sphi 0, %s60
      %s78 = sphi 0, %s78
      %s80 = sphi 0, %s78
      %s81 = sphi 0, %s80
      %s95 = sphi 0, %s81
      %s99 = sphi 0, %s99
      %s101 = sphi 0, %s99
      %s102 = sphi 0, %s101
      %s116 = sphi 0, %s102
      %s122 = sphi 0, %s124
      %s125 = sphi 0, %s122
      %s126 = sphi 0, %s125
      %s142 = sphi 0, %s126
      %s148 = sphi 0, %s150
      %s151 = sphi 0, %s148
      %s152 = sphi 0, %s151
      %s168 = sphi 0, %s152
      %s174 = sphi 0, %s176
      %s177 = sphi 0, %s174
      %s178 = sphi 0, %s177
      %s194 = sphi 0, %s178
    $region4: #{tpu_custom_call.1} parent=1 // loop_header_branch
      %26 = sbr.rel (%p24) target = $region8
    $region5: #{tpu_custom_call.1} parent=1 // loop_body
      %s28 = ssub.s32 %s23, 1
      %s29 = ssub.s32 %s23, 2
      %s30 = sadd.s32 %s23, 1
      %s31 = ssub.s32 %s23, %s30
      %p32 = scmp.eq.s32.totalorder %s31, 0
      %s34 = sadd.s32 %s33, 1
      %s35 = scalar_select %p32, %s33, %s34
      %p38 = pneg %p32
      %p39 = scmp.eq.s32.totalorder %s23, 1
      %p40 = por %p38, %p39
      %p41 = scmp.ne.s32.totalorder %s33, %s36
      %p42 = scmp.eq.s32.totalorder %s23, 0
      %p43 = por %p41, %p42
      %p44 = scmp.ne.s32.totalorder %s33, %s36
      %p45 = scmp.eq.s32.totalorder %s28, 1
      %p46 = por %p44, %p45
      %p47 = scmp.ne.s32.totalorder %s36, %s37
      %p48 = scmp.eq.s32.totalorder %s28, 0
      %p49 = por %p47, %p48
      %p50 = scmp.ne.s32.totalorder %s36, %s37
      %p51 = scmp.eq.s32.totalorder %s29, 1
      %p52 = por %p50, %p51
      %p54 = scmp.ne.s32.totalorder %s37, %s53
      %p55 = scmp.eq.s32.totalorder %s29, 0
      %p56 = por %p54, %p55
      %s58 = sadd.s32 %s57, 1
      %p61 = scmp.eq.s32.totalorder %s23, 1
      %p62 = scmp.ne.s32.totalorder %s57, %s59
      %p63 = scmp.eq.s32.totalorder %s23, 0
      %p64 = por %p62, %p63
      %p65 = scmp.ne.s32.totalorder %s57, %s59
      %p66 = scmp.eq.s32.totalorder %s28, 1
      %p67 = por %p65, %p66
      %p68 = scmp.ne.s32.totalorder %s59, %s60
      %p69 = scmp.eq.s32.totalorder %s28, 0
      %p70 = por %p68, %p69
      %p71 = scmp.ne.s32.totalorder %s59, %s60
      %p72 = scmp.eq.s32.totalorder %s29, 1
      %p73 = por %p71, %p72
      %p75 = scmp.ne.s32.totalorder %s60, %s74
      %p76 = scmp.eq.s32.totalorder %s29, 0
      %p77 = por %p75, %p76
      %s79 = sadd.s32 %s78, 1
      %p82 = scmp.eq.s32.totalorder %s23, 1
      %p83 = scmp.ne.s32.totalorder %s78, %s80
      %p84 = scmp.eq.s32.totalorder %s23, 0
      %p85 = por %p83, %p84
      %p86 = scmp.ne.s32.totalorder %s78, %s80
      %p87 = scmp.eq.s32.totalorder %s28, 1
      %p88 = por %p86, %p87
      %p89 = scmp.ne.s32.totalorder %s80, %s81
      %p90 = scmp.eq.s32.totalorder %s28, 0
      %p91 = por %p89, %p90
      %p92 = scmp.ne.s32.totalorder %s80, %s81
      %p93 = scmp.eq.s32.totalorder %s29, 1
      %p94 = por %p92, %p93
      %p96 = scmp.ne.s32.totalorder %s81, %s95
      %p97 = scmp.eq.s32.totalorder %s29, 0
      %p98 = por %p96, %p97
      %s100 = sadd.s32 %s99, 1
      %p103 = scmp.eq.s32.totalorder %s23, 1
      %p104 = scmp.ne.s32.totalorder %s99, %s101
      %p105 = scmp.eq.s32.totalorder %s23, 0
      %p106 = por %p104, %p105
      %p107 = scmp.ne.s32.totalorder %s99, %s101
      %p108 = scmp.eq.s32.totalorder %s28, 1
      %p109 = por %p107, %p108
      %p110 = scmp.ne.s32.totalorder %s101, %s102
      %p111 = scmp.eq.s32.totalorder %s28, 0
      %p112 = por %p110, %p111
      %p113 = scmp.ne.s32.totalorder %s101, %s102
      %p114 = scmp.eq.s32.totalorder %s29, 1
      %p115 = por %p113, %p114
      %p117 = scmp.ne.s32.totalorder %s102, %s116
      %p118 = scmp.eq.s32.totalorder %s29, 0
      %p119 = por %p117, %p118
      %s120 = ssub.s32 %s23, %s30
      %p121 = scmp.eq.s32.totalorder %s120, 0
      %s123 = sadd.s32 %s122, 1
      %s124 = scalar_select %p121, %s122, %s123
      %p127 = pneg %p121
      %p128 = scmp.eq.s32.totalorder %s23, 1
      %p129 = por %p127, %p128
      %p130 = scmp.ne.s32.totalorder %s122, %s125
      %p131 = scmp.eq.s32.totalorder %s23, 0
      %p132 = por %p130, %p131
      %p133 = scmp.ne.s32.totalorder %s122, %s125
      %p134 = scmp.eq.s32.totalorder %s28, 1
      %p135 = por %p133, %p134
      %p136 = scmp.ne.s32.totalorder %s125, %s126
      %p137 = scmp.eq.s32.totalorder %s28, 0
      %p138 = por %p136, %p137
      %p139 = scmp.ne.s32.totalorder %s125, %s126
      %p140 = scmp.eq.s32.totalorder %s29, 1
      %p141 = por %p139, %p140
      %p143 = scmp.ne.s32.totalorder %s126, %s142
      %p144 = scmp.eq.s32.totalorder %s29, 0
      %p145 = por %p143, %p144
      %s146 = ssub.s32 %s23, %s30
      %p147 = scmp.eq.s32.totalorder %s146, 0
      %s149 = sadd.s32 %s148, 1
      %s150 = scalar_select %p147, %s148, %s149
      %p153 = pneg %p147
      %p154 = scmp.eq.s32.totalorder %s23, 1
      %p155 = por %p153, %p154
      %p156 = scmp.ne.s32.totalorder %s148, %s151
      %p157 = scmp.eq.s32.totalorder %s23, 0
      %p158 = por %p156, %p157
      %p159 = scmp.ne.s32.totalorder %s148, %s151
      %p160 = scmp.eq.s32.totalorder %s28, 1
      %p161 = por %p159, %p160
      %p162 = scmp.ne.s32.totalorder %s151, %s152
      %p163 = scmp.eq.s32.totalorder %s28, 0
      %p164 = por %p162, %p163
      %p165 = scmp.ne.s32.totalorder %s151, %s152
      %p166 = scmp.eq.s32.totalorder %s29, 1
      %p167 = por %p165, %p166
      %p169 = scmp.ne.s32.totalorder %s152, %s168
      %p170 = scmp.eq.s32.totalorder %s29, 0
      %p171 = por %p169, %p170
      %s172 = ssub.s32 %s23, %s30
      %p173 = scmp.eq.s32.totalorder %s172, 0
      %s175 = sadd.s32 %s174, 1
      %s176 = scalar_select %p173, %s174, %s175
      %p179 = pneg %p173
      %p180 = scmp.eq.s32.totalorder %s23, 1
      %p181 = por %p179, %p180
      %p182 = scmp.ne.s32.totalorder %s174, %s177
      %p183 = scmp.eq.s32.totalorder %s23, 0
      %p184 = por %p182, %p183
      %p185 = scmp.ne.s32.totalorder %s174, %s177
      %p186 = scmp.eq.s32.totalorder %s28, 1
      %p187 = por %p185, %p186
      %p188 = scmp.ne.s32.totalorder %s177, %s178
      %p189 = scmp.eq.s32.totalorder %s28, 0
      %p190 = por %p188, %p189
      %p191 = scmp.ne.s32.totalorder %s177, %s178
      %p192 = scmp.eq.s32.totalorder %s29, 1
      %p193 = por %p191, %p192
      %p195 = scmp.ne.s32.totalorder %s178, %s194
      %p196 = scmp.eq.s32.totalorder %s29, 0
      %p197 = por %p195, %p196
      %p198 = scmp.le.s32.totalorder 1, %s23
      %p199 = scmp.lt.s32.totalorder %s23, 3
      %p200 = pnand %p198, %p199
      %p201 = pneg %p200
      // Predicated region
      $region9: #{tpu_custom_call.1} parent=5 // pred_check
        _
      $region10: #{tpu_custom_call.1} parent=5 // pred_check_branch
        %203 = sbr.rel (%p200) target = $region12
      $region11: #{tpu_custom_call.1} parent=5 // pred_region
        %s204 = ssub.s32 %s23, 1
        // Predicated region
        $region13: #{tpu_custom_call.1} parent=11 // pred_check
          %p205 = pneg %p70
        $region14: #{tpu_custom_call.1} parent=11 // pred_check_branch
          %207 = sbr.rel (%p205) target = $region16
        $region15: #{tpu_custom_call.1} parent=11 // pred_region
          _
        $region16: #{tpu_custom_call.1} parent=11 // pred_fallthru
          _
        // Predicated region
        $region17: #{tpu_custom_call.1} parent=11 // pred_check
          %p208 = pneg %p91
        $region18: #{tpu_custom_call.1} parent=11 // pred_check_branch
          %210 = sbr.rel (%p208) target = $region20
        $region19: #{tpu_custom_call.1} parent=11 // pred_region
          %s212 = ssub.s32 256, 256
          %213 = vsyncadd [#allocation6], %s212
          %s214 = sshll.u32 [#allocation5], 4
          %s215 = int_to_ptr.vmem [resolvable:$true] %s214
          %220 = dma.hbm_to_vmem [thread:$0]  %s2, 256, %s215, [#allocation6], 64, 64, 4
        $region20: #{tpu_custom_call.1} parent=11 // pred_fallthru
          _
        // Predicated region
        $region21: #{tpu_custom_call.1} parent=11 // pred_check
          %p221 = pneg %p112
        $region22: #{tpu_custom_call.1} parent=11 // pred_check_branch
          %223 = sbr.rel (%p221) target = $region24
        $region23: #{tpu_custom_call.1} parent=11 // pred_region
          _
        $region24: #{tpu_custom_call.1} parent=11 // pred_fallthru
          _
      $region12: #{tpu_custom_call.1} parent=5 // pred_fallthru
        _
      %p224 = scmp.lt.s32.totalorder %s23, 2
      // Predicated region
      $region25: #{tpu_custom_call.1} parent=5 // pred_check
        %p225 = pneg %p224
      $region26: #{tpu_custom_call.1} parent=5 // pred_check_branch
        %227 = sbr.rel (%p225) target = $region28
      $region27: #{tpu_custom_call.1} parent=5 // pred_region
        // Predicated region
        $region29: #{tpu_custom_call.1} parent=27 // pred_check
          %p228 = pneg %p43
        $region30: #{tpu_custom_call.1} parent=27 // pred_check_branch
          %230 = sbr.rel (%p228) target = $region32
        $region31: #{tpu_custom_call.1} parent=27 // pred_region
          %s231 = sand.u32 %s33, 1
          %s232 = scalar_lea.sflag [#allocation3], %s231
          %s233 = sand.u32 %s33, 1
          %s234 = smul.addr %s233, 4
          %s235 = scalar_lea.vmem [#allocation2], %s234
          %s237 = ssub.s32 64, 64
          %238 = vsyncadd %s232, %s237
          %s239 = smul.addr %s23, 64
          %s240 = scalar_lea.hbm %s0, %s239
          %s242 = sshll.u32 %s235, 4
          %s243 = int_to_ptr.vmem [resolvable:$true] %s242
          %245 = dma.hbm_to_vmem [thread:$0]  %s240, 64, %s243, %s232
        $region32: #{tpu_custom_call.1} parent=27 // pred_fallthru
          _
        // Predicated region
        $region33: #{tpu_custom_call.1} parent=27 // pred_check
          %p246 = pneg %p132
        $region34: #{tpu_custom_call.1} parent=27 // pred_check_branch
          %248 = sbr.rel (%p246) target = $region36
        $region35: #{tpu_custom_call.1} parent=27 // pred_region
          %p249 = scmp.lt.s32.totalorder %s23, 1
          %s250 = scalar_select %p249, %s23, 1
          %s251 = smul.addr %s250, 8
          %s252 = scalar_lea.vmem %s4, %s251
        $region36: #{tpu_custom_call.1} parent=27 // pred_fallthru
          _
      $region28: #{tpu_custom_call.1} parent=5 // pred_fallthru
        _
      %p253 = scmp.le.s32.totalorder 1, %s23
      %p254 = scmp.lt.s32.totalorder %s23, 3
      %p255 = pnand %p253, %p254
      %p256 = pneg %p255
      // Predicated region
      $region37: #{tpu_custom_call.1} parent=5 // pred_check
        _
      $region38: #{tpu_custom_call.1} parent=5 // pred_check_branch
        %258 = sbr.rel (%p255) target = $region40
      $region39: #{tpu_custom_call.1} parent=5 // pred_region
        %s259 = ssub.s32 %s23, 1
        %s260 = sand.u32 %s36, 1
        %s261 = scalar_lea.sflag [#allocation3], %s260
        %s262 = sand.u32 %s36, 1
        %s263 = smul.addr %s262, 4
        %s264 = scalar_lea.vmem [#allocation2], %s263
        // Predicated region
        $region41: #{tpu_custom_call.1} parent=39 // pred_check
          %p265 = pneg %p49
        $region42: #{tpu_custom_call.1} parent=39 // pred_check_branch
          %267 = sbr.rel (%p265) target = $region44
        $region43: #{tpu_custom_call.1} parent=39 // pred_region
          %268 = dma.done %s261, 64
        $region44: #{tpu_custom_call.1} parent=39 // pred_fallthru
          _
        // Predicated region
        $region45: #{tpu_custom_call.1} parent=39 // pred_check
          %p269 = pneg %p91
        $region46: #{tpu_custom_call.1} parent=39 // pred_check_branch
          %271 = sbr.rel (%p269) target = $region48
        $region47: #{tpu_custom_call.1} parent=39 // pred_region
          %272 = dma.done [#allocation6], 256
        $region48: #{tpu_custom_call.1} parent=39 // pred_fallthru
          _
        %s273 = sand.u32 %s36, 1
        %s274 = scalar_lea.sflag [#allocation3], %s273
        %s275 = sand.u32 %s36, 1
        %s276 = smul.addr %s275, 4
        %s277 = scalar_lea.vmem [#allocation2], %s276
        %p278 = pneg %p49
        %p279 = pneg %p46
        %p280 = pneg %p70
        %p281 = pneg %p67
        %p282 = pneg %p91
        %p283 = pneg %p88
        %p284 = pneg %p112
        %p285 = pneg %p109
        %p286 = scmp.lt.s32.totalorder %s28, 1
        %s287 = scalar_select %p286, %s28, 1
        %s288 = smul.addr %s287, 8
        %s289 = scalar_lea.vmem %s4, %s288
        %p290 = pneg %p138
        %p291 = pneg %p135
        %p292 = pneg %p164
        %p293 = pneg %p161
        %s294 = sand.u32 %s151, 1
        %s295 = scalar_lea.sflag [#allocation4], %s294
        %s296 = sand.u32 %s151, 1
        %s297 = smul.addr %s296, 4
        %s298 = scalar_lea.vmem [#allocation7], %s297
        %p299 = pneg %p190
        %p300 = pneg %p187
        %s301 = sand.u32 %s177, 1
        %s302 = scalar_lea.sflag [#allocation9], %s301
        %s303 = sand.u32 %s177, 1
        %s304 = smul.addr %s303, 8
        %s305 = scalar_lea.vmem [#allocation8], %s304
        %p306 = scmp.lt.s32.totalorder %s28, 1
        %s307 = scalar_select %p306, %s28, 1
        %s308 = smul.addr %s307, 8
        %s309 = scalar_lea.vmem %s4, %s308
        %v311 = vld [vmem:[%s264] sm:$0xf]
        %v312 = vld [vmem:[%s1] sm:$0xf]
        %v313 = vld [vmem:[%s1 + $0x4] sm:$0xf]
        %v314 = vld [vmem:[%s1 + $0x8] sm:$0xf]
        %v315 = vld [vmem:[%s1 + $0xc] sm:$0xf]
        %v320 = vunpack.c.l.b16 %v312
        %v321 = vunpack.c.l.b16 %v313
        %v322 = vunpack.c.l.b16 %v314
        %v323 = vunpack.c.l.b16 %v315
        %v324 = vpack.c.b16 %v321, %v320
        %v325 = vpack.c.b16 %v323, %v322
        %vm328 = vcmask 261120
        %v330 = vsel %vm328, %v311, 0
        %332 = vmatprep.subr.bf16.mxu0 0
        %333 = vmatpush1.bf16.msra.mxu0 0
        %334 = vmatprep.subr.bf16.mxu0 0
        %335 = vmatpush1.bf16.msra.mxu0 0
        %336 = vmatprep.subr.bf16.mxu0 0
        %337 = vmatpush1.bf16.msra.mxu0 0
        %338 = vmatprep.subr.bf16.mxu0 0
        %339 = vmatpush1.bf16.msra.mxu0 0
        %340 = vmatprep.subr.bf16.mxu0 0
        %341 = vmatpush1.bf16.msra.mxu0 0
        %342 = vmatprep.subr.bf16.mxu0 0
        %343 = vmatpush1.bf16.msra.mxu0 0
        %344 = vmatprep.subr.bf16.mxu0 0
        %345 = vmatpush1.bf16.msra.mxu0 %v325
        %346 = vmatprep.subr.bf16.mxu0 0
        %347 = vmatpush1.bf16.msra.mxu0 %v324
        %348 = vmatprep.subr.bf16.mxu0 0
        %349 = vmatpush2.bf16.msra.mxu0 0
        %350 = vmatprep.subr.bf16.mxu0 0
        %351 = vmatpush2.bf16.msra.mxu0 0
        %352 = vmatprep.subr.bf16.mxu0 0
        %353 = vmatpush2.bf16.msra.mxu0 0
        %354 = vmatprep.subr.bf16.mxu0 0
        %355 = vmatpush2.bf16.msra.mxu0 0
        %356 = vmatprep.subr.bf16.mxu0 0
        %357 = vmatpush2.bf16.msra.mxu0 0
        %358 = vmatprep.subr.bf16.mxu0 0
        %359 = vmatpush2.bf16.msra.mxu0 0
        %360 = vmatprep.subr.bf16.mxu0 0
        %361 = vmatpush2.bf16.msra.mxu0 0
        %362 = vmatprep.subr.bf16.mxu0 0
        %363 = vmatpush2.bf16.msra.mxu0 0
        %364 = vmatprep.mubr.bf16.mxu0 0
        %365 = vmatmul.mubr.bf16.gmra.mxu0 %v330
        %v366 = vpop.f32.mrf.mxu0
        %v367 = vadd.f32 0.0, %v366
        %v368 = vpop.f32.mrf.mxu0
        %v369 = vpop.f32.mrf.mxu0
        %v370 = vpop.f32.mrf.mxu0
        %371 = vdwg.mxu0
        %v372 = vtanh.pop %v367
        %v373 = vpack.c.bf16 %v372, %v372
        %v374 = vld [vmem:[#allocation5] sm:$0xf]
        %v375 = vld [vmem:[#allocation5 + $0x4] sm:$0xf]
        %v376 = vld [vmem:[#allocation5 + $0x8] sm:$0xf]
        %v377 = vld [vmem:[#allocation5 + $0xc] sm:$0xf]
        %v378 = vld [vmem:[%s3] sm:$0x1]
        %v380 = vlaneseq
        %v381 = vshrl.u32 %v380, 7
        %v382 = vsub.s32 0, %v381
        %v383 = vrot.slane %v378, %v382
        %v389 = vunpack.c.l.b16 %v374
        %v390 = vunpack.c.l.b16 %v375
        %v391 = vunpack.c.l.b16 %v376
        %v392 = vunpack.c.l.b16 %v377
        %v393 = vpack.c.b16 %v390, %v389
        %v394 = vpack.c.b16 %v392, %v391
        %v398 = vsel %vm328, %v373, 0
        %400 = vmatprep.subr.bf16.mxu0 0
        %401 = vmatpush1.bf16.msra.mxu0 0
        %402 = vmatprep.subr.bf16.mxu0 0
        %403 = vmatpush1.bf16.msra.mxu0 0
        %404 = vmatprep.subr.bf16.mxu0 0
        %405 = vmatpush1.bf16.msra.mxu0 0
        %406 = vmatprep.subr.bf16.mxu0 0
        %407 = vmatpush1.bf16.msra.mxu0 0
        %408 = vmatprep.subr.bf16.mxu0 0
        %409 = vmatpush1.bf16.msra.mxu0 0
        %410 = vmatprep.subr.bf16.mxu0 0
        %411 = vmatpush1.bf16.msra.mxu0 0
        %412 = vmatprep.subr.bf16.mxu0 0
        %413 = vmatpush1.bf16.msra.mxu0 %v394
        %414 = vmatprep.subr.bf16.mxu0 0
        %415 = vmatpush1.bf16.msra.mxu0 %v393
        %416 = vmatprep.subr.bf16.mxu0 0
        %417 = vmatpush2.bf16.msra.mxu0 0
        %418 = vmatprep.subr.bf16.mxu0 0
        %419 = vmatpush2.bf16.msra.mxu0 0
        %420 = vmatprep.subr.bf16.mxu0 0
        %421 = vmatpush2.bf16.msra.mxu0 0
        %422 = vmatprep.subr.bf16.mxu0 0
        %423 = vmatpush2.bf16.msra.mxu0 0
        %424 = vmatprep.subr.bf16.mxu0 0
        %425 = vmatpush2.bf16.msra.mxu0 0
        %426 = vmatprep.subr.bf16.mxu0 0
        %427 = vmatpush2.bf16.msra.mxu0 0
        %428 = vmatprep.subr.bf16.mxu0 0
        %429 = vmatpush2.bf16.msra.mxu0 0
        %430 = vmatprep.subr.bf16.mxu0 0
        %431 = vmatpush2.bf16.msra.mxu0 0
        %432 = vmatprep.mubr.bf16.mxu0 0
        %433 = vmatmul.mubr.bf16.gmra.mxu0 %v398
        %v434 = vpop.f32.mrf.mxu0
        %v435 = vadd.f32 %v383, %v434
        %v436 = vpop.f32.mrf.mxu0
        %v437 = vpop.f32.mrf.mxu0
        %v438 = vpop.f32.mrf.mxu0
        %439 = vdwg.mxu0
        %v440 = vpack.c.bf16 %v435, %v435
        %441 = vst [vmem:[%s298] sm:$0xf] %v440
        %442 = vmax.xlane.f32.xlu0 %v435
        %v443 = vpop.xlane.xlu0 %442
        %v444 = vsub.f32 %v435, %v443
        %v445 = vmul.f32 %v444, 1.442695
        %v446 = vpow.pop %v445
        %447 = vadd.xlane.f32.xlu0 %v446
        %v448 = vpop.xlane.xlu0 %447
        %v449 = vlog2.pop %v448
        %v450 = vmul.f32 %v449, 0.6931472
        %v451 = vadd.f32 %v443, %v450
        %v452 = vld [vmem:[%s309] sm:$0xff]
        %v453 = vlaneseq
        %v454 = vand.u32 %v453, 127
        %455 = vset.pattern.permute.xlu0 0
        %456 = vperm.xlu0 %455, %v452
        %v457 = vpop.permute.xlu0 %456
        %vm458 = vcmp.eq.s32.totalorder %v454, %v457
        %v459 = vsel %vm458, %v435, 0.0
        %460 = vadd.xlane.f32.xlu0 %v459
        %v461 = vpop.xlane.xlu0 %460
        %vm462 = vcmp.ge.s32.totalorder %v452, 0
        %v463 = vsel %vm462, 1, 0
        %v464 = vcvt.s32.f32 %v463
        %v465 = vsub.f32 %v451, %v461
        %v466 = vmul.f32 %v465, %v464
        %vm467 = vcmask 7168
        %v468 = vsel %vm467, %v466, 0.0
        %469 = vadd.xlane.f32.xlu0 %v468
        %v470 = vpop.xlane.xlu0 %469
        %v471 = vrot.slane %v470, 4
        %v472 = vadd.f32 %v470, %v471
        %v473 = vrot.slane %v472, 2
        %v474 = vadd.f32 %v472, %v473
        %v475 = vrot.slane %v474, 1
        %v476 = vadd.f32 %v474, %v475
        %s477 = vtos %v476
        %v478 = vstv %s477
        %479 = vst [vmem:[%s305] sm:$0xff] %v478
        %s480 = sand.u32 %s151, 1
        %s481 = scalar_lea.sflag [#allocation4], %s480
        %s482 = sand.u32 %s151, 1
        %s483 = smul.addr %s482, 4
        %s484 = scalar_lea.vmem [#allocation7], %s483
        %s485 = sand.u32 %s177, 1
        %s486 = scalar_lea.sflag [#allocation9], %s485
        %s487 = sand.u32 %s177, 1
        %s488 = smul.addr %s487, 8
        %s489 = scalar_lea.vmem [#allocation8], %s488
        // Predicated region
        $region49: #{tpu_custom_call.1} parent=39 // pred_check
          %p490 = pneg %p161
        $region50: #{tpu_custom_call.1} parent=39 // pred_check_branch
          %492 = sbr.rel (%p490) target = $region52
        $region51: #{tpu_custom_call.1} parent=39 // pred_region
          %s494 = ssub.s32 64, 64
          %495 = vsyncadd %s481, %s494
          %s496 = smul.addr %s28, 64
          %s497 = scalar_lea.hbm %s5, %s496
          %s499 = sshll.u32 %s484, 4
          %s500 = int_to_ptr.vmem [resolvable:$true] %s499
          %502 = dma.vmem_to_hbm [thread:$0]  %s500, 64, %s497, %s481
        $region52: #{tpu_custom_call.1} parent=39 // pred_fallthru
          _
        // Predicated region
        $region53: #{tpu_custom_call.1} parent=39 // pred_check
          %p503 = pneg %p187
        $region54: #{tpu_custom_call.1} parent=39 // pred_check_branch
          %505 = sbr.rel (%p503) target = $region56
        $region55: #{tpu_custom_call.1} parent=39 // pred_region
          %s507 = ssub.s32 128, 128
          %508 = vsyncadd %s486, %s507
          %s509 = smul.addr %s28, 128
          %s510 = scalar_lea.hbm %s6, %s509
          %s512 = sshll.u32 %s489, 4
          %s513 = int_to_ptr.vmem [resolvable:$true] %s512
          %515 = dma.vmem_to_hbm [thread:$0]  %s513, 128, %s510, %s486
        $region56: #{tpu_custom_call.1} parent=39 // pred_fallthru
          _
      $region40: #{tpu_custom_call.1} parent=5 // pred_fallthru
        _
      %p516 = scmp.le.s32.totalorder 2, %s23
      // Predicated region
      $region57: #{tpu_custom_call.1} parent=5 // pred_check
        %p517 = pneg %p516
      $region58: #{tpu_custom_call.1} parent=5 // pred_check_branch
        %519 = sbr.rel (%p517) target = $region60
      $region59: #{tpu_custom_call.1} parent=5 // pred_region
        %s520 = ssub.s32 %s23, 2
        // Predicated region
        $region61: #{tpu_custom_call.1} parent=59 // pred_check
          %p521 = pneg %p167
        $region62: #{tpu_custom_call.1} parent=59 // pred_check_branch
          %523 = sbr.rel (%p521) target = $region64
        $region63: #{tpu_custom_call.1} parent=59 // pred_region
          %s524 = sand.u32 %s152, 1
          %s525 = scalar_lea.sflag [#allocation4], %s524
          %s526 = sand.u32 %s152, 1
          %s527 = smul.addr %s526, 4
          %s528 = scalar_lea.vmem [#allocation7], %s527
          %529 = dma.done %s525, 64
        $region64: #{tpu_custom_call.1} parent=59 // pred_fallthru
          _
        // Predicated region
        $region65: #{tpu_custom_call.1} parent=59 // pred_check
          %p530 = pneg %p193
        $region66: #{tpu_custom_call.1} parent=59 // pred_check_branch
          %532 = sbr.rel (%p530) target = $region68
        $region67: #{tpu_custom_call.1} parent=59 // pred_region
          %s533 = sand.u32 %s178, 1
          %s534 = scalar_lea.sflag [#allocation9], %s533
          %s535 = sand.u32 %s178, 1
          %s536 = smul.addr %s535, 8
          %s537 = scalar_lea.vmem [#allocation8], %s536
          %538 = dma.done %s534, 128
        $region68: #{tpu_custom_call.1} parent=59 // pred_fallthru
          _
      $region60: #{tpu_custom_call.1} parent=5 // pred_fallthru
        _
    $region6: #{tpu_custom_call.1} parent=1 // loop_footer
      %s27 = sadd.s32 1, %s23
    $region7: #{tpu_custom_call.1} parent=1 // loop_footer_branch
      %22 = sbr.rel target = $region3
    $region8: #{tpu_custom_call.1} parent=1 // loop_exit
      _
    %539 = vsyncpa [#allocation3], 1
    %s540 = scalar_lea.sflag [#allocation3], 1
    %541 = vsyncpa %s540, 1
    %542 = vsyncpa [#allocation6], 1
    %543 = vsyncpa [#allocation4], 1
    %s544 = scalar_lea.sflag [#allocation4], 1
    %545 = vsyncpa %s544, 1
    %546 = vsyncpa [#allocation9], 1
    %s547 = scalar_lea.sflag [#allocation9], 1
    %548 = vsyncpa %s547, 1

</llo_original>
